<compile_context>
chip_gen: v7x
topology: tpu7x:2x2x1
jax: 0.10.0
libtpu: 0.0.40
codegen_flags: <defaults>
</compile_context>

<pallas_src>
import jax
import jax.numpy as jnp
from jax.experimental import pallas as pl
from jax.experimental.pallas import tpu as pltpu


def _is_contiguous(idx):
    return len(idx) > 0 and tuple(idx) == tuple(range(idx[0], idx[0] + len(idx)))


def _round_up(n, m):
    return ((n + m - 1) // m) * m


def _make_periodic_cat_kernel(ind, ind_, scale_list):
    """Kernel over feature-major blocks: x_ref (ndim, T) -> o_ref (out_dim, T)."""
    k = len(ind)
    n_rest = len(ind_)
    uniform_scale = all(s == scale_list[0] for s in scale_list)

    def kernel(x_ref, o_ref):
        # ---- periodic features: pack the k selected rows into one dense slab.
        if uniform_scale and _is_contiguous(ind):
            arg = x_ref[ind[0]:ind[0] + k, :].astype(jnp.float32) * scale_list[0]
        else:
            cols = [x_ref[i:i + 1, :].astype(jnp.float32) * s
                    for i, s in zip(ind, scale_list)]
            arg = cols[0] if k == 1 else jnp.concatenate(cols, axis=0)

        # One dense sin and one dense cos over the (k, T) slab; direct slice
        # stores into the output block (no concatenated full-width temp).
        o_ref[0:k, :] = jnp.sin(arg).astype(o_ref.dtype)
        o_ref[k:2 * k, :] = jnp.cos(arg).astype(o_ref.dtype)

        # ---- pass-through features (kept in the input dtype).
        if n_rest:
            if _is_contiguous(ind_):
                o_ref[2 * k:, :] = x_ref[ind_[0]:ind_[0] + n_rest, :]
            else:
                rest = [x_ref[i:i + 1, :] for i in ind_]
                o_ref[2 * k:, :] = (rest[0] if n_rest == 1
                                    else jnp.concatenate(rest, axis=0))

    return kernel


def periodic_features_cat(x, ind, scale=1.0, *, tile_cols=65536):
    """Apply PeriodicFeaturesCat along the last axis of `x`.

    x     : array of shape (..., ndim)
    ind   : iterable of static ints, features converted to [sin, cos]
    scale : scalar or iterable (len == len(ind)) applied before sin/cos
    """
    ndim = x.shape[-1]
    ind = tuple(int(i) for i in ind)
    k = len(ind)

    if len(set(ind)) != k:
        raise ValueError(f"duplicate entries in ind: {ind}")
    for i in ind:
        if not 0 <= i < ndim:
            raise ValueError(f"index {i} out of range for ndim={ndim}")

    if k == 0:          # nothing periodic -> identity (matches the module)
        return x

    ind_ = tuple(i for i in range(ndim) if i not in ind)
    out_dim = 2 * k + len(ind_)

    if hasattr(scale, "__len__"):
        scale_list = tuple(float(s) for s in scale)
        if len(scale_list) != k:
            raise ValueError(
                f"scale has length {len(scale_list)}, expected {k} (== len(ind))")
    else:
        scale_list = (float(scale),) * k

    batch_shape = x.shape[:-1]
    rows = 1
    for d in batch_shape:
        rows *= d

    # Feature-major (lane-dense) slab: (ndim, rows).  One XLA transpose copy
    # in and one out; inside the kernel every vreg / store is 128-lane dense.
    x_fm = jnp.transpose(x.reshape(rows, ndim))          # (ndim, rows)

    # Lane tile: multiple of 128 (or the full extent for tiny inputs); force
    # at least two grid steps when there is enough work so both v7x
    # TensorCores get a share of the "parallel" row axis.
    if rows >= 256:
        tc = min(int(tile_cols), _round_up(pl.cdiv(rows, 2), 128))
    else:
        tc = rows
    grid = (pl.cdiv(rows, tc),)

    itemsize = jnp.dtype(x.dtype).itemsize
    cost = pl.CostEstimate(
        flops=2 * k * rows,
        transcendentals=2 * k * rows,
        bytes_accessed=(ndim + out_dim) * rows * itemsize,
    )

    out_fm = pl.pallas_call(
        _make_periodic_cat_kernel(ind, ind_, scale_list),
        out_shape=jax.ShapeDtypeStruct((out_dim, rows), x.dtype),
        grid=grid,
        in_specs=[pl.BlockSpec((ndim, tc), lambda i: (0, i))],
        out_specs=pl.BlockSpec((out_dim, tc), lambda i: (0, i)),
        compiler_params=pltpu.CompilerParams(
            dimension_semantics=("parallel",),
            vmem_limit_bytes=32 * 1024 * 1024),
        cost_estimate=cost,
    )(x_fm)

    # Back to the batch-major layout the module returns
    # (one XLA copy + a free reshape).
    return jnp.transpose(out_fm).reshape(*batch_shape, out_dim)


def _reference(x, ind, scale):
    ndim = x.shape[-1]
    ind = tuple(int(i) for i in ind)
    ind_ = tuple(i for i in range(ndim) if i not in ind)
    xp = x[..., jnp.asarray(ind)].astype(jnp.float32) * jnp.asarray(
        scale, dtype=jnp.float32)
    return jnp.concatenate(
        [jnp.sin(xp).astype(x.dtype), jnp.cos(xp).astype(x.dtype),
         x[..., jnp.asarray(ind_)]], axis=-1)


if __name__ == "__main__":
    key = jax.random.PRNGKey(0)

    # Small shapes consistent with the module: batch=2, seq=16, ndim=8.
    ndim = 8
    ind = (0, 2, 5)
    scale = 2.0
    x = jax.random.normal(key, (2, 16, ndim), dtype=jnp.float32)

    y = periodic_features_cat(x, ind, scale)
    jax.block_until_ready(y)
    y_ref = _reference(x, ind, scale)
    assert y.shape == (2, 16, 2 * len(ind) + (ndim - len(ind)))
    assert y.dtype == x.dtype
    assert jnp.allclose(y, y_ref, atol=1e-5, rtol=1e-5)

    # Multi-block grid + masked partial last lane-block + per-index scales.
    x2 = jax.random.normal(jax.random.PRNGKey(0), (4, 1030, ndim),
                           dtype=jnp.float32)
    scale_vec = (1.0, 0.5, 3.0)
    y2 = periodic_features_cat(x2, ind, scale_vec)
    jax.block_until_ready(y2)
    assert jnp.allclose(y2, _reference(x2, ind, scale_vec), atol=1e-5, rtol=1e-5)

    # bf16 input stays bf16 (sin/cos computed in f32 inside the kernel);
    # also exercises the contiguous-ind fast path.
    x3 = jax.random.normal(jax.random.PRNGKey(0), (2, 16, ndim),
                           dtype=jnp.bfloat16)
    ind3 = (1, 2, 3, 4)
    y3 = periodic_features_cat(x3, ind3, scale=0.5)
    jax.block_until_ready(y3)
    y3_ref = _reference(x3, ind3, 0.5)
    assert y3.dtype == jnp.bfloat16
    assert jnp.allclose(y3.astype(jnp.float32), y3_ref.astype(jnp.float32),
                        atol=2e-2, rtol=2e-2)

    print("KERNEL_OK")
</pallas_src>

<mosaic_0001>
module attributes {stable_mosaic.version = 11 : i64} {
  func.func @kernel(%arg0: i32, %arg1: memref<8x32xf32, #tpu.memory_space<vmem>>, %arg2: memref<11x32xf32, #tpu.memory_space<vmem>>) attributes {dimension_semantics = [#tpu.dimension_semantics<parallel>], iteration_bounds = array<i64: 1>, scalar_prefetch = 0 : i64, scratch_operands = 0 : i64, tpu.core_type = #tpu.core_type<tc>, window_params = [{transform_indices = @transform_0, window_bounds = array<i64: 8, 32>}, {transform_indices = @transform_1, window_bounds = array<i64: 11, 32>}]} {
    %c0 = arith.constant 0 : index
    %c0_0 = arith.constant 0 : index
    %0 = vector.load %arg1[%c0, %c0_0] : memref<8x32xf32, #tpu.memory_space<vmem>>, vector<1x32xf32>
    %cst = arith.constant 2.000000e+00 : f32
    %1 = vector.broadcast %cst : f32 to vector<1x32xf32>
    %2 = arith.mulf %0, %1 : vector<1x32xf32>
    %c2 = arith.constant 2 : index
    %c0_1 = arith.constant 0 : index
    %3 = vector.load %arg1[%c2, %c0_1] : memref<8x32xf32, #tpu.memory_space<vmem>>, vector<1x32xf32>
    %cst_2 = arith.constant 2.000000e+00 : f32
    %4 = vector.broadcast %cst_2 : f32 to vector<1x32xf32>
    %5 = arith.mulf %3, %4 : vector<1x32xf32>
    %c5 = arith.constant 5 : index
    %c0_3 = arith.constant 0 : index
    %6 = vector.load %arg1[%c5, %c0_3] : memref<8x32xf32, #tpu.memory_space<vmem>>, vector<1x32xf32>
    %cst_4 = arith.constant 2.000000e+00 : f32
    %7 = vector.broadcast %cst_4 : f32 to vector<1x32xf32>
    %8 = arith.mulf %6, %7 : vector<1x32xf32>
    %9 = tpu.concatenate %2, %5, %8 in 0 : vector<1x32xf32>, vector<1x32xf32>, vector<1x32xf32> -> vector<3x32xf32>
    %10 = math.sin %9 : vector<3x32xf32>
    %c0_5 = arith.constant 0 : index
    %c0_6 = arith.constant 0 : index
    %11 = vector.load %arg2[%c0_5, %c0_6] : memref<11x32xf32, #tpu.memory_space<vmem>>, vector<3x32xf32>
    tpu.vector_store %arg2[%c0_5, %c0_6], %10 {strides = array<i32>} : memref<11x32xf32, #tpu.memory_space<vmem>>, vector<3x32xf32>,
    %12 = math.cos %9 : vector<3x32xf32>
    %c3 = arith.constant 3 : index
    %c0_7 = arith.constant 0 : index
    %13 = vector.load %arg2[%c3, %c0_7] : memref<11x32xf32, #tpu.memory_space<vmem>>, vector<3x32xf32>
    tpu.vector_store %arg2[%c3, %c0_7], %12 {strides = array<i32>} : memref<11x32xf32, #tpu.memory_space<vmem>>, vector<3x32xf32>,
    %c1 = arith.constant 1 : index
    %c0_8 = arith.constant 0 : index
    %14 = vector.load %arg1[%c1, %c0_8] : memref<8x32xf32, #tpu.memory_space<vmem>>, vector<1x32xf32>
    %c3_9 = arith.constant 3 : index
    %c0_10 = arith.constant 0 : index
    %15 = vector.load %arg1[%c3_9, %c0_10] : memref<8x32xf32, #tpu.memory_space<vmem>>, vector<1x32xf32>
    %c4 = arith.constant 4 : index
    %c0_11 = arith.constant 0 : index
    %16 = vector.load %arg1[%c4, %c0_11] : memref<8x32xf32, #tpu.memory_space<vmem>>, vector<1x32xf32>
    %c6 = arith.constant 6 : index
    %c0_12 = arith.constant 0 : index
    %17 = vector.load %arg1[%c6, %c0_12] : memref<8x32xf32, #tpu.memory_space<vmem>>, vector<1x32xf32>
    %c7 = arith.constant 7 : index
    %c0_13 = arith.constant 0 : index
    %18 = vector.load %arg1[%c7, %c0_13] : memref<8x32xf32, #tpu.memory_space<vmem>>, vector<1x32xf32>
    %19 = tpu.concatenate %14, %15, %16, %17, %18 in 0 : vector<1x32xf32>, vector<1x32xf32>, vector<1x32xf32>, vector<1x32xf32>, vector<1x32xf32> -> vector<5x32xf32>
    %c6_14 = arith.constant 6 : index
    %c0_15 = arith.constant 0 : index
    %20 = vector.load %arg2[%c6_14, %c0_15] : memref<11x32xf32, #tpu.memory_space<vmem>>, vector<5x32xf32>
    tpu.vector_store %arg2[%c6_14, %c0_15], %19 {strides = array<i32>} : memref<11x32xf32, #tpu.memory_space<vmem>>, vector<5x32xf32>,
    return
  }
  func.func @transform_0(%arg0: i32) -> (i32, i32) {
    %c0_i32 = arith.constant 0 : i32
    %c0_i32_0 = arith.constant 0 : i32
    return %c0_i32, %arg0 : i32, i32
  }
  func.func @transform_1(%arg0: i32) -> (i32, i32) {
    %c0_i32 = arith.constant 0 : i32
    %c0_i32_0 = arith.constant 0 : i32
    return %c0_i32, %arg0 : i32, i32
  }
}

</mosaic_0001>

<llo_original>
// kernel: tpu_custom_call.1
$region0: #{tpu_custom_call.1}
  #allocation0 [shape = 'u32[]', space=smem, size = 0x4, offset = 0x4, fixed_abs, tag = 'smem constant byte address 0x4 - core index']
  #allocation1 [shape = 'u32[144,128]{1,0:T(1,128)}', space=vmem, size = 0x12000, scoped, tag = 'internal scratch']
  %s0 = inlined_call_operand.hbm [shape: f32[8,32], index: 0, kind: input, shape index: {}]
  %s1 = inlined_call_operand.hbm [shape: f32[11,32], index: 1, kind: output, shape index: {}]
  %s2 = sld [smem:[#allocation0]]
  $region18: #{tpu_custom_call.1} parent=0
    _
  %s4 = ssub.s32 1, %s2
  %s5 = scalar_select 0, %s4, %s2
  $region1: #{tpu_custom_call.1} parent=0
    #allocation2 [shape = 'u8[4096]{0}', space=vmem, size = 0x1000, scoped, tag = 'input window, operand 0, single buffered']
    #allocation3 [shape = 's32[1]{0}', space=sflag, size = 0x4, scoped, tag = 'scoped memory for tpu_custom_call.1']
    #allocation4 [shape = 's32[1]{0}', space=sflag, size = 0x4, scoped, tag = 'scoped memory for tpu_custom_call.1']
    #allocation5 [shape = 'u8[8192]{0}', space=vmem, size = 0x2000, scoped, tag = 'output window, operand 0, single buffered']
    %6 = vsyncpa [#allocation3], 0
    %7 = vsyncpa [#allocation4], 0
    // Predicated region
    $region2: #{tpu_custom_call.1} parent=1 // pred_check
      _
    $region3: #{tpu_custom_call.1} parent=1 // pred_check_branch
      %9 = sbr.rel (0) target = $region5
    $region4: #{tpu_custom_call.1} parent=1 // pred_region
      %s11 = ssub.s32 128, 128
      %12 = vsyncadd [#allocation3], %s11
      %s14 = sshll.u32 [#allocation2], 4
      %s15 = int_to_ptr.vmem [resolvable:$true] %s14
      %17 = dma.hbm_to_vmem [thread:$0]  %s0, 128, %s15, [#allocation3]
    $region5: #{tpu_custom_call.1} parent=1 // pred_fallthru
      _
    // Predicated region
    $region6: #{tpu_custom_call.1} parent=1 // pred_check
      _
    $region7: #{tpu_custom_call.1} parent=1 // pred_check_branch
      %19 = sbr.rel (0) target = $region9
    $region8: #{tpu_custom_call.1} parent=1 // pred_region
      %20 = dma.done [#allocation3], 128
    $region9: #{tpu_custom_call.1} parent=1 // pred_fallthru
      _
    %v21 = vld [vmem:[#allocation2] sm:$0x1]
    %v22 = vmul.f32 %v21, 2.0
    %v23 = vld [vmem:[#allocation2 + $0x2] sm:$0x1]
    %v24 = vmul.f32 %v23, 2.0
    %v25 = vld [vmem:[#allocation2 + $0x5] sm:$0x1]
    %v26 = vmul.f32 %v25, 2.0
    %v28 = vrot.slane %v24, 7
    %v31 = vrot.slane %v26, 6
    %vm33 = vcmask 1040384
    %v34 = vsel %vm33, %v22, %v28
    %vm35 = vcmask 1041408
    %v36 = vsel %vm35, %v34, %v31
    %v37 = vand.u32 2147483647, %v36
    %vm38 = vcmp.le.f32.partialorder %v37, 0.7853982
    %vm39 = vcmp.lt.s32.totalorder %v36, 0
    %v40 = vand.u32 %v36, 2139095040
    %v41 = vshrl.u32 %v40, 23
    %v42 = vsub.s32 %v41, 127
    %v43 = vand.u32 2147483647, %v36
    %v44 = vand.u32 %v43, 8388607
    %v45 = vor.u32 %v44, 8388608
    %v46 = vsub.s32 0, %v45
    %v47 = vadd.s32 %v42, 1
    %vm48 = vcmp.gt.s32.totalorder %v47, 0
    %v49 = vsel %vm48, %v47, 0
    %v50 = vshrl.u32 %v49, 5
    %v51 = vand.u32 %v49, 31
    %v52 = vsub.s32 32, %v51
    %v53 = vshrl.u32 683565275, %v52
    %v54 = vshll.u32 683565275, %v51
    %v55 = vshrl.u32 2475754826, %v52
    %v56 = vor.u32 %v54, %v55
    %v57 = vshll.u32 2475754826, %v51
    %v58 = vshrl.u32 2131351028, %v52
    %v59 = vor.u32 %v57, %v58
    %v60 = vshll.u32 2131351028, %v51
    %v61 = vshrl.u32 2102212464, %v52
    %v62 = vor.u32 %v60, %v61
    %v63 = vshll.u32 2102212464, %v51
    %v64 = vshrl.u32 920167782, %v52
    %v65 = vor.u32 %v63, %v64
    %v66 = vshll.u32 920167782, %v51
    %v67 = vshrl.u32 1326507024, %v52
    %v68 = vor.u32 %v66, %v67
    %vm69 = vcmp.lt.s32.totalorder %v50, 1
    %vm70 = vcmp.lt.s32.totalorder %v50, 2
    %vm71 = vcmp.lt.s32.totalorder %v50, 3
    %vm72 = vcmp.lt.s32.totalorder %v50, 4
    %v73 = vsel %vm69, %v53, %v56
    %v74 = vsel %vm72, %v62, 2102212464
    %v75 = vsel %vm71, %v59, %v74
    %v76 = vsel %vm70, %v73, %v75
    %v77 = vsel %vm69, %v56, %v59
    %v78 = vsel %vm72, %v65, 920167782
    %v79 = vsel %vm71, %v62, %v78
    %v80 = vsel %vm70, %v77, %v79
    %v81 = vsel %vm69, %v59, %v62
    %v82 = vsel %vm72, %v68, 1326507024
    %v83 = vsel %vm71, %v65, %v82
    %v84 = vsel %vm70, %v81, %v83
    %v85 = vshll.u32 %v45, 8
    %v86 = vmul.u32.u64.compose %v85, %v84
    %v87 = vextract.low.u32 %v86
    %v88 = vextract.high.u32 %v86
    %v89 = vmul.u32.u64.compose %v85, %v80
    %v90 = vextract.low.u32 %v89
    %v91 = vextract.high.u32 %v89
    %v92 = vmul.u32 %v85, %v76
    %v93 = vadd.s32 %v88, %v90
    %vm94 = vc.u32 %v88, %v90
    %v95 = vadd.s32 %v91, 1
    %v96 = vsel %vm94, %v95, %v91
    %v97 = vadd.s32 %v92, %v96
    %v98 = vadd.s32 %v97, 536870912
    %v99 = vshrl.u32 %v98, 30
    %v100 = vshll.u32 %v99, 30
    %v101 = vsub.s32 %v97, %v100
    %vm102 = vcmp.lt.s32.totalorder %v101, 0
    %v103 = vsub.s32 0, %v101
    %v104 = vsel %vm102, %v103, %v101
    %v105 = vclz %v104
    %v106 = vsub.s32 %v105, 2
    %vm107 = vcmp.gt.s32.totalorder 0, %v106
    %v108 = vsel %vm107, 0, %v106
    %v109 = vsub.s32 32, %v108
    %v110 = vshll.u32 %v101, %v108
    %v111 = vshrl.u32 %v93, %v109
    %v112 = vor.u32 %v110, %v111
    %v113 = vsub.s32 4294967266, %v108
    %v114 = vadd.s32 %v113, 127
    %v115 = vshll.u32 %v114, 23
    %v116 = vor.u32 4788187, %v115
    %v117 = vand.u32 2147483647, %v116
    %v119 = vcvt.s32.f32 %v112
    %v120 = vmul.f32 %v119, %v117
    %v121 = vxor.u32 %v120, 2147483648
    %v122 = vsel %vm39, %v121, %v120
    %v123 = vsub.s32 4, %v99
    %v124 = vsel %vm39, %v123, %v99
    %v125 = vsel %vm38, %v36, %v122
    %v126 = vsel %vm38, 0, %v124
    %v127 = vcosq.f32.pop %v125
    %v128 = vsinq.f32.pop %v125
    %vm129 = vweird.f32 %v36
    %v130 = vadd.s32 %v126, 3
    %v131 = vand.u32 %v130, 3
    %vm132 = vcmp.lt.s32.totalorder %v131, 2
    %vm133 = vcmp.eq.s32.totalorder %v131, 0
    %v134 = vxor.u32 %v128, 2147483648
    %v135 = vsel %vm133, %v127, %v134
    %vm136 = vcmp.eq.s32.totalorder %v131, 2
    %v137 = vxor.u32 %v127, 2147483648
    %v138 = vsel %vm136, %v137, %v128
    %v139 = vsel %vm132, %v135, %v138
    %v140 = vsel %vm129, nan, %v139
    %vm141 = vcmask 256000
    %142 = vst.msk [vmem:[#allocation5] sm:$0x7] %vm141, %v140
    %v143 = vand.u32 2147483647, %v36
    %vm144 = vcmp.le.f32.partialorder %v143, 0.7853982
    %vm145 = vcmp.lt.s32.totalorder %v36, 0
    %v146 = vand.u32 %v36, 2139095040
    %v147 = vshrl.u32 %v146, 23
    %v148 = vsub.s32 %v147, 127
    %v149 = vand.u32 2147483647, %v36
    %v150 = vand.u32 %v149, 8388607
    %v151 = vor.u32 %v150, 8388608
    %v152 = vsub.s32 0, %v151
    %v153 = vadd.s32 %v148, 1
    %vm154 = vcmp.gt.s32.totalorder %v153, 0
    %v155 = vsel %vm154, %v153, 0
    %v156 = vshrl.u32 %v155, 5
    %v157 = vand.u32 %v155, 31
    %v158 = vsub.s32 32, %v157
    %v159 = vshrl.u32 683565275, %v158
    %v160 = vshll.u32 683565275, %v157
    %v161 = vshrl.u32 2475754826, %v158
    %v162 = vor.u32 %v160, %v161
    %v163 = vshll.u32 2475754826, %v157
    %v164 = vshrl.u32 2131351028, %v158
    %v165 = vor.u32 %v163, %v164
    %v166 = vshll.u32 2131351028, %v157
    %v167 = vshrl.u32 2102212464, %v158
    %v168 = vor.u32 %v166, %v167
    %v169 = vshll.u32 2102212464, %v157
    %v170 = vshrl.u32 920167782, %v158
    %v171 = vor.u32 %v169, %v170
    %v172 = vshll.u32 920167782, %v157
    %v173 = vshrl.u32 1326507024, %v158
    %v174 = vor.u32 %v172, %v173
    %vm175 = vcmp.lt.s32.totalorder %v156, 1
    %vm176 = vcmp.lt.s32.totalorder %v156, 2
    %vm177 = vcmp.lt.s32.totalorder %v156, 3
    %vm178 = vcmp.lt.s32.totalorder %v156, 4
    %v179 = vsel %vm175, %v159, %v162
    %v180 = vsel %vm178, %v168, 2102212464
    %v181 = vsel %vm177, %v165, %v180
    %v182 = vsel %vm176, %v179, %v181
    %v183 = vsel %vm175, %v162, %v165
    %v184 = vsel %vm178, %v171, 920167782
    %v185 = vsel %vm177, %v168, %v184
    %v186 = vsel %vm176, %v183, %v185
    %v187 = vsel %vm175, %v165, %v168
    %v188 = vsel %vm178, %v174, 1326507024
    %v189 = vsel %vm177, %v171, %v188
    %v190 = vsel %vm176, %v187, %v189
    %v191 = vshll.u32 %v151, 8
    %v192 = vmul.u32.u64.compose %v191, %v190
    %v193 = vextract.low.u32 %v192
    %v194 = vextract.high.u32 %v192
    %v195 = vmul.u32.u64.compose %v191, %v186
    %v196 = vextract.low.u32 %v195
    %v197 = vextract.high.u32 %v195
    %v198 = vmul.u32 %v191, %v182
    %v199 = vadd.s32 %v194, %v196
    %vm200 = vc.u32 %v194, %v196
    %v201 = vadd.s32 %v197, 1
    %v202 = vsel %vm200, %v201, %v197
    %v203 = vadd.s32 %v198, %v202
    %v204 = vadd.s32 %v203, 536870912
    %v205 = vshrl.u32 %v204, 30
    %v206 = vshll.u32 %v205, 30
    %v207 = vsub.s32 %v203, %v206
    %vm208 = vcmp.lt.s32.totalorder %v207, 0
    %v209 = vsub.s32 0, %v207
    %v210 = vsel %vm208, %v209, %v207
    %v211 = vclz %v210
    %v212 = vsub.s32 %v211, 2
    %vm213 = vcmp.gt.s32.totalorder 0, %v212
    %v214 = vsel %vm213, 0, %v212
    %v215 = vsub.s32 32, %v214
    %v216 = vshll.u32 %v207, %v214
    %v217 = vshrl.u32 %v199, %v215
    %v218 = vor.u32 %v216, %v217
    %v219 = vsub.s32 4294967266, %v214
    %v220 = vadd.s32 %v219, 127
    %v221 = vshll.u32 %v220, 23
    %v222 = vor.u32 4788187, %v221
    %v223 = vand.u32 2147483647, %v222
    %v225 = vcvt.s32.f32 %v218
    %v226 = vmul.f32 %v225, %v223
    %v227 = vxor.u32 %v226, 2147483648
    %v228 = vsel %vm145, %v227, %v226
    %v229 = vsub.s32 4, %v205
    %v230 = vsel %vm145, %v229, %v205
    %v231 = vsel %vm144, %v36, %v228
    %v232 = vsel %vm144, 0, %v230
    %v233 = vcosq.f32.pop %v231
    %v234 = vsinq.f32.pop %v231
    %vm235 = vweird.f32 %v36
    %v236 = vand.u32 %v232, 3
    %vm237 = vcmp.lt.s32.totalorder %v236, 2
    %vm238 = vcmp.eq.s32.totalorder %v236, 0
    %v239 = vxor.u32 %v234, 2147483648
    %v240 = vsel %vm238, %v233, %v239
    %vm241 = vcmp.eq.s32.totalorder %v236, 2
    %v242 = vxor.u32 %v233, 2147483648
    %v243 = vsel %vm241, %v242, %v234
    %v244 = vsel %vm237, %v240, %v243
    %v245 = vsel %vm235, nan, %v244
    %246 = vst.msk [vmem:[#allocation5 + $0x3] sm:$0x7] %vm141, %v245
    %v247 = vld [vmem:[#allocation2 + $0x1] sm:$0x1]
    %v248 = vld [vmem:[#allocation2 + $0x3] sm:$0x1]
    %v249 = vld [vmem:[#allocation2 + $0x4] sm:$0x1]
    %v250 = vld [vmem:[#allocation2 + $0x6] sm:$0x1]
    %v251 = vld [vmem:[#allocation2 + $0x7] sm:$0x1]
    %v253 = vrot.slane %v248, 7
    %v256 = vrot.slane %v249, 6
    %v259 = vrot.slane %v250, 5
    %v262 = vrot.slane %v251, 4
    %v264 = vsel %vm33, %v247, %v253
    %v265 = vsel %vm35, %v264, %v256
    %vm266 = vcmask 1042432
    %v267 = vsel %vm266, %v265, %v259
    %vm268 = vcmask 1043456
    %v269 = vsel %vm268, %v267, %v262
    %vm270 = vcmask 258048
    %271 = vst.msk [vmem:[#allocation5 + $0x6] sm:$0x1f] %vm270, %v269
    // Predicated region
    $region10: #{tpu_custom_call.1} parent=1 // pred_check
      _
    $region11: #{tpu_custom_call.1} parent=1 // pred_check_branch
      %273 = sbr.rel (0) target = $region13
    $region12: #{tpu_custom_call.1} parent=1 // pred_region
      %s275 = ssub.s32 256, 256
      %276 = vsyncadd [#allocation4], %s275
      %s277 = sshll.u32 [#allocation5], 4
      %s278 = int_to_ptr.vmem [resolvable:$true] %s277
      %283 = dma.vmem_to_hbm [thread:$0]  %s278, 256, %s1, [#allocation4], 128, 128, 8
    $region13: #{tpu_custom_call.1} parent=1 // pred_fallthru
      _
    // Predicated region
    $region14: #{tpu_custom_call.1} parent=1 // pred_check
      _
    $region15: #{tpu_custom_call.1} parent=1 // pred_check_branch
      %285 = sbr.rel (0) target = $region17
    $region16: #{tpu_custom_call.1} parent=1 // pred_region
      %286 = dma.done [#allocation4], 256
    $region17: #{tpu_custom_call.1} parent=1 // pred_fallthru
      _
    %287 = vsyncpa [#allocation3], 1
    %288 = vsyncpa [#allocation4], 1

</llo_original>
